<compile_context>
chip_gen: v7x
topology: tpu7x:2x2x1
jax: 0.10.0
libtpu: 0.0.40
codegen_flags: <defaults>
</compile_context>

<pallas_src>
from functools import partial

import jax
import jax.numpy as jnp
from jax.experimental import pallas as pl
from jax.experimental.pallas import tpu as pltpu


CLASS_PAD = 128  # pad classifier output to a full 128-lane slab (lane-dense store)


# -----------------------------------------------------------------------------
# Fused Pallas kernel: GCN stack + attention readout + classification head.
# One grid step == one block of Bt batch elements, flattened to M = Bt*N rows.
# -----------------------------------------------------------------------------
def fused_gnn_kernel(*refs, num_layers, window, rows_per_block,
                     nodes_per_graph, batch_per_block):
    x_ref, band_ref = refs[0], refs[1]
    layer_w_refs = refs[2:2 + num_layers]
    (wl_ref, wd_ref, wo_ref,
     bias_ref, outb_ref) = refs[2 + num_layers:2 + num_layers + 5]
    prob_ref = refs[-1]

    W = window
    M = rows_per_block          # Bt * N (flattened matmul M dimension)
    N = nodes_per_graph
    Bt = batch_per_block
    hidden = wl_ref.shape[1]

    x = x_ref[...]              # (M, F) f32, row-normalized features
    band = band_ref[...]        # (M, 2W+1) f32, D^-1/2 A D^-1/2 banded layout
    biases = bias_ref[...]      # (num_layers + 4, H) f32 stacked parameter rows

    # Pre-broadcast the 2W+1 band columns to (M, H) slabs ONCE, outside the
    # layer loop (JAX does not CSE broadcast_in_dim; 2W+1 slabs at these sizes
    # fit easily in the vreg/VMEM budget).
    coef = [jnp.broadcast_to(band[:, c:c + 1], (M, hidden))
            for c in range(2 * W + 1)]

    def aggregate(support):
        # adj_norm @ support for the banded window graph over the flattened
        # row axis: 2W+1 scaled pltpu.roll'ed adds. pltpu.roll is an XLU
        # sublane rotate (separate slot from the VPU multiplies); rows that
        # wrap across a graph's boundary (or across the block boundary) are
        # multiplied by band coefficients that are exactly 0 there.
        agg = coef[W] * support
        for o in range(1, W + 1):
            # neighbor i+o:  result[i] = support[(i + o) mod M]
            agg = agg + coef[W + o] * pltpu.roll(support, shift=M - o, axis=0)
            # neighbor i-o:  result[i] = support[(i - o) mod M]
            agg = agg + coef[W - o] * pltpu.roll(support, shift=o, axis=0)
        return agg

    # --- ReGCN stack: relu(adj_norm @ (h @ W) + b) (+ residual for l > 0) ---
    h = x
    for l in range(num_layers):
        support = jnp.dot(h.astype(jnp.bfloat16), layer_w_refs[l][...],
                          preferred_element_type=jnp.float32)       # (M, H)
        out = jax.nn.relu(aggregate(support) + biases[l:l + 1, :])
        h = out if l == 0 else h + out                               # residual

    # --- soft-attention graph readout (att_op == "sum") ---
    # (H,1) attention projection as a VPU lane reduction (not a 1-lane matmul).
    att_w = biases[num_layers + 2:num_layers + 3, :]                 # (1, H)
    att_b = biases[num_layers + 3:num_layers + 4, 0:1]               # (1, 1)
    att = jax.nn.sigmoid(
        jnp.sum(h * att_w, axis=-1, keepdims=True) + att_b)          # (M, 1)
    ln = jax.nn.relu(
        jnp.dot(h.astype(jnp.bfloat16), wl_ref[...],
                preferred_element_type=jnp.float32)
        + biases[num_layers:num_layers + 1, :])                      # (M, H)
    weighted = att * ln                                              # (M, H)
    # Per-graph sum over the N node rows of each batch element. N is a
    # multiple of 8 so the reshape keeps the (8,128) tiling (no relayout).
    g = weighted.reshape(Bt, N, hidden).sum(axis=1)                  # (Bt, H)

    # --- PredictionClassification head + sigmoid (fused epilogue) ---
    hid = jnp.tanh(
        jnp.dot(g.astype(jnp.bfloat16), wd_ref[...],
                preferred_element_type=jnp.float32)
        + biases[num_layers + 1:num_layers + 2, :])                  # (Bt, H)
    logits = jnp.dot(hid.astype(jnp.bfloat16), wo_ref[...],
                     preferred_element_type=jnp.float32) + outb_ref[...]  # (Bt, CPAD)
    prob_ref[0] = jax.nn.sigmoid(logits)


# -----------------------------------------------------------------------------
# Pallas wrapper
# -----------------------------------------------------------------------------
def fused_gnn_forward(x_flat, band_block, layer_ws, wl, wd, wo, bias_stack,
                      out_b, *, window, num_blocks, batch, n_nodes):
    BN, F = x_flat.shape
    assert batch % num_blocks == 0
    Bt = batch // num_blocks
    M = Bt * n_nodes
    c_pad = wo.shape[1]
    num_layers = len(layer_ws)

    inputs = [x_flat, band_block]
    in_specs = [
        pl.BlockSpec((M, F), lambda i: (i, 0)),                  # per-block rows
        pl.BlockSpec(band_block.shape, lambda i: (0, 0)),        # DMA'd once
    ]
    # Weights / stacked biases: constant index_maps -> VMEM-resident across
    # grid steps (single DMA each).
    for w_l in layer_ws:
        inputs.append(w_l)
        in_specs.append(pl.BlockSpec(w_l.shape, lambda i: (0, 0)))
    for arr in (wl, wd, wo, bias_stack, out_b):
        inputs.append(arr)
        in_specs.append(pl.BlockSpec(arr.shape, lambda i: (0, 0)))

    out = pl.pallas_call(
        partial(fused_gnn_kernel, num_layers=num_layers, window=window,
                rows_per_block=M, nodes_per_graph=n_nodes, batch_per_block=Bt),
        out_shape=jax.ShapeDtypeStruct((num_blocks, Bt, c_pad), jnp.float32),
        grid=(num_blocks,),
        in_specs=in_specs,
        out_specs=pl.BlockSpec((1, Bt, c_pad), lambda i: (i, 0, 0)),
        compiler_params=pltpu.CompilerParams(
            dimension_semantics=("parallel",),   # split blocks across TCs (v7x)
        ),
    )(*inputs)
    return out.reshape(batch, c_pad)             # (B, CLASS_PAD)


# -----------------------------------------------------------------------------
# Parameter construction (deterministic, synthetic). Matmul weights stored in
# bf16 (MXU operand dtype), biases / attention row in f32.
# -----------------------------------------------------------------------------
def init_params(key, vocab_size, feature_dim, hidden, num_layers, num_classes,
                class_pad=CLASS_PAD):
    assert num_classes <= class_pad
    keys = iter(jax.random.split(key, num_layers + 6))
    p = {}
    p["w_embeddings"] = 0.1 * jax.random.normal(
        next(keys), (vocab_size, feature_dim), jnp.float32)
    for l in range(num_layers):
        fin = feature_dim if l == 0 else hidden
        w = (1.0 / jnp.sqrt(fin)) * jax.random.normal(
            next(keys), (fin, hidden), jnp.float32)
        p[f"gcn_w{l}"] = w.astype(jnp.bfloat16)
        p[f"gcn_b{l}"] = jnp.zeros((1, hidden), jnp.float32)
    p["att_w"] = (1.0 / jnp.sqrt(hidden)) * jax.random.normal(
        next(keys), (1, hidden), jnp.float32)
    p["att_b"] = jnp.zeros((1, 1), jnp.float32)
    p["ln_w"] = ((1.0 / jnp.sqrt(hidden)) * jax.random.normal(
        next(keys), (hidden, hidden), jnp.float32)).astype(jnp.bfloat16)
    p["ln_b"] = jnp.zeros((1, hidden), jnp.float32)
    p["dense_w"] = ((1.0 / jnp.sqrt(hidden)) * jax.random.normal(
        next(keys), (hidden, hidden), jnp.float32)).astype(jnp.bfloat16)
    p["dense_b"] = jnp.zeros((1, hidden), jnp.float32)
    out_w = (1.0 / jnp.sqrt(hidden)) * jax.random.normal(
        next(keys), (hidden, num_classes), jnp.float32)
    p["out_w"] = jnp.zeros((hidden, class_pad), jnp.bfloat16
                           ).at[:, :num_classes].set(out_w.astype(jnp.bfloat16))
    p["out_b"] = jnp.zeros((1, class_pad), jnp.float32)
    return p


# -----------------------------------------------------------------------------
# Full forward pass (GNNReGVD.forward equivalent, labels optional)
# -----------------------------------------------------------------------------
def gnn_regvd_forward(input_ids, params, *, num_layers, window_size,
                      num_classes, labels=None):
    # --- build_graph (simplified): embedding lookup + sliding-window graph ---
    emb = params["w_embeddings"][input_ids]                    # (B, N, F)
    B, N, F = emb.shape
    w = window_size

    # Grid split: keep >= 2 "parallel" steps when B is even (v7x has 2 TCs),
    # otherwise a single fully flattened step (per-step fixed cost dominates
    # at these sizes on single-TC v5e/v6e).
    num_blocks = 2 if (B >= 2 and B % 2 == 0) else 1
    Bt = B // num_blocks
    if num_blocks > 1 and (Bt * N) % 8 != 0:
        num_blocks, Bt = 1, B          # keep the row block sublane-aligned

    # --- preprocess_adj: D^-1/2 A D^-1/2 stored as a (N, 2w+1) band ---
    # band[i, d] = coefficient of neighbor (i + d - w); EXACTLY 0.0 outside
    # [0, N) — correctness of the pltpu.roll aggregation and of the batch
    # flattening relies on these hard zeros (do not replace with clip-only).
    idx = jnp.arange(N)
    offs = jnp.arange(-w, w + 1)
    nbr = idx[:, None] + offs[None, :]                          # (N, 2w+1)
    valid = (nbr >= 0) & (nbr < N)
    deg = (jnp.minimum(idx, w) + jnp.minimum(N - 1 - idx, w) + 1).astype(jnp.float32)
    d_inv_sqrt = 1.0 / jnp.sqrt(deg)
    band = jnp.where(valid,
                     d_inv_sqrt[:, None] * d_inv_sqrt[jnp.clip(nbr, 0, N - 1)],
                     0.0).astype(jnp.float32)                   # (N, 2w+1)
    # Batch-independent: only tile to the per-block row count (DMA'd once).
    band_block = jnp.tile(band, (Bt, 1))                        # (Bt*N, 2w+1)
    # Node mask from preprocess_adj is all-ones here (no padded nodes) -> folded away.

    # --- preprocess_features: row-normalize features, then flatten batch ---
    rowsum = emb.sum(-1, keepdims=True)
    r_inv = jnp.where(jnp.abs(rowsum) < 1e-12, 0.0, 1.0 / rowsum)
    x_flat = (emb * r_inv).astype(jnp.float32).reshape(B * N, F)

    # --- stack all (1, H) parameter rows into ONE f32 input ---
    # rows: [gcn_b_0..L-1, ln_b, dense_b, att_w, att_b(broadcast)]
    hidden = params["ln_w"].shape[1]
    bias_stack = jnp.concatenate(
        [params[f"gcn_b{l}"] for l in range(num_layers)]
        + [params["ln_b"], params["dense_b"], params["att_w"],
           jnp.broadcast_to(params["att_b"], (1, hidden))],
        axis=0)                                                 # (L+4, H)

    layer_ws = [params[f"gcn_w{l}"] for l in range(num_layers)]

    # --- fused GCN stack + readout + classifier head (single Pallas call) ---
    prob_pad = fused_gnn_forward(
        x_flat, band_block, layer_ws,
        params["ln_w"], params["dense_w"], params["out_w"], bias_stack,
        params["out_b"],
        window=window_size, num_blocks=num_blocks, batch=B, n_nodes=N)
    prob = prob_pad[:, :num_classes]                            # drop lane padding

    if labels is not None:
        labels = labels.astype(jnp.float32)
        loss = jnp.log(prob[:, 0] + 1e-10) * labels + \
               jnp.log((1.0 - prob)[:, 0] + 1e-10) * (1.0 - labels)
        loss = -loss.mean()
        return loss, prob
    return prob


# -----------------------------------------------------------------------------
if __name__ == "__main__":
    # Small deterministic configuration consistent with the module's forward.
    B, N = 2, 16                # batch, sequence length (= graph nodes)
    VOCAB = 64
    FEATURE_DIM = 128           # args.feature_dim_size (lane-aligned)
    HIDDEN = 128                # args.hidden_size (lane-aligned)
    NUM_LAYERS = 2              # args.num_GNN_layers
    NUM_CLASSES = 2             # args.num_classes
    WINDOW = 2                  # args.window_size

    key = jax.random.PRNGKey(0)
    k_ids, k_params, k_labels = jax.random.split(key, 3)

    input_ids = jax.random.randint(k_ids, (B, N), 0, VOCAB, dtype=jnp.int32)
    labels = jax.random.randint(k_labels, (B,), 0, 2, dtype=jnp.int32)
    params = init_params(k_params, VOCAB, FEATURE_DIM, HIDDEN, NUM_LAYERS,
                         NUM_CLASSES)

    fwd = jax.jit(partial(gnn_regvd_forward, num_layers=NUM_LAYERS,
                          window_size=WINDOW, num_classes=NUM_CLASSES))

    prob = fwd(input_ids, params)
    loss, prob2 = fwd(input_ids, params, labels=labels)
    jax.block_until_ready((prob, loss, prob2))

    assert prob.shape == (B, NUM_CLASSES)
    assert jnp.all(jnp.isfinite(prob)) and jnp.isfinite(loss)
    print("KERNEL_OK")
</pallas_src>

<mosaic_0001>
module attributes {stable_mosaic.version = 11 : i64} {
  func.func @fused_gnn_kernel(%arg0: i32, %arg1: memref<16x128xf32, #tpu.memory_space<vmem>>, %arg2: memref<16x5xf32, #tpu.memory_space<vmem>>, %arg3: memref<128x128xbf16, #tpu.memory_space<vmem>>, %arg4: memref<128x128xbf16, #tpu.memory_space<vmem>>, %arg5: memref<128x128xbf16, #tpu.memory_space<vmem>>, %arg6: memref<128x128xbf16, #tpu.memory_space<vmem>>, %arg7: memref<128x128xbf16, #tpu.memory_space<vmem>>, %arg8: memref<6x128xf32, #tpu.memory_space<vmem>>, %arg9: memref<1x128xf32, #tpu.memory_space<vmem>>, %arg10: memref<1x1x128xf32, #tpu.memory_space<vmem>>) attributes {dimension_semantics = [#tpu.dimension_semantics<parallel>], iteration_bounds = array<i64: 2>, scalar_prefetch = 0 : i64, scratch_operands = 0 : i64, tpu.core_type = #tpu.core_type<tc>, window_params = [{transform_indices = @transform_0, window_bounds = array<i64: 16, 128>}, {pipeline_mode = #tpu.pipeline_mode<synchronous>, transform_indices = @transform_1, window_bounds = array<i64: 16, 5>}, {pipeline_mode = #tpu.pipeline_mode<synchronous>, transform_indices = @transform_2, window_bounds = array<i64: 128, 128>}, {pipeline_mode = #tpu.pipeline_mode<synchronous>, transform_indices = @transform_3, window_bounds = array<i64: 128, 128>}, {pipeline_mode = #tpu.pipeline_mode<synchronous>, transform_indices = @transform_4, window_bounds = array<i64: 128, 128>}, {pipeline_mode = #tpu.pipeline_mode<synchronous>, transform_indices = @transform_5, window_bounds = array<i64: 128, 128>}, {pipeline_mode = #tpu.pipeline_mode<synchronous>, transform_indices = @transform_6, window_bounds = array<i64: 128, 128>}, {pipeline_mode = #tpu.pipeline_mode<synchronous>, transform_indices = @transform_7, window_bounds = array<i64: 6, 128>}, {pipeline_mode = #tpu.pipeline_mode<synchronous>, transform_indices = @transform_8, window_bounds = array<i64: 1, 128>}, {transform_indices = @transform_9, window_bounds = array<i64: 1, 1, 128>}]} {
    %c0 = arith.constant 0 : index
    %c0_0 = arith.constant 0 : index
    %0 = vector.load %arg1[%c0, %c0_0] : memref<16x128xf32, #tpu.memory_space<vmem>>, vector<16x128xf32>
    %c0_1 = arith.constant 0 : index
    %c0_2 = arith.constant 0 : index
    %1 = vector.load %arg2[%c0_1, %c0_2] : memref<16x5xf32, #tpu.memory_space<vmem>>, vector<16x5xf32>
    %c0_3 = arith.constant 0 : index
    %c0_4 = arith.constant 0 : index
    %2 = vector.load %arg8[%c0_3, %c0_4] : memref<6x128xf32, #tpu.memory_space<vmem>>, vector<6x128xf32>
    %3 = vector.extract_strided_slice %1 {offsets = [0, 0], sizes = [16, 1], strides = [1, 1]} : vector<16x5xf32> to vector<16x1xf32>
    %4 = vector.shape_cast %3 : vector<16x1xf32> to vector<16x1xf32>
    %5 = vector.broadcast %4 : vector<16x1xf32> to vector<16x128xf32>
    %6 = vector.extract_strided_slice %1 {offsets = [0, 1], sizes = [16, 1], strides = [1, 1]} : vector<16x5xf32> to vector<16x1xf32>
    %7 = vector.shape_cast %6 : vector<16x1xf32> to vector<16x1xf32>
    %8 = vector.broadcast %7 : vector<16x1xf32> to vector<16x128xf32>
    %9 = vector.extract_strided_slice %1 {offsets = [0, 2], sizes = [16, 1], strides = [1, 1]} : vector<16x5xf32> to vector<16x1xf32>
    %10 = vector.shape_cast %9 : vector<16x1xf32> to vector<16x1xf32>
    %11 = vector.broadcast %10 : vector<16x1xf32> to vector<16x128xf32>
    %12 = vector.extract_strided_slice %1 {offsets = [0, 3], sizes = [16, 1], strides = [1, 1]} : vector<16x5xf32> to vector<16x1xf32>
    %13 = vector.shape_cast %12 : vector<16x1xf32> to vector<16x1xf32>
    %14 = vector.broadcast %13 : vector<16x1xf32> to vector<16x128xf32>
    %15 = vector.extract_strided_slice %1 {offsets = [0, 4], sizes = [16, 1], strides = [1, 1]} : vector<16x5xf32> to vector<16x1xf32>
    %16 = vector.shape_cast %15 : vector<16x1xf32> to vector<16x1xf32>
    %17 = vector.broadcast %16 : vector<16x1xf32> to vector<16x128xf32>
    %18 = arith.truncf %0 : vector<16x128xf32> to vector<16x128xbf16>
    %c0_5 = arith.constant 0 : index
    %c0_6 = arith.constant 0 : index
    %19 = vector.load %arg3[%c0_5, %c0_6] : memref<128x128xbf16, #tpu.memory_space<vmem>>, vector<128x128xbf16>
    %cst = arith.constant dense<0.000000e+00> : vector<16x128xf32>
    %20 = tpu.matmul %18, %19, %cst {dimension_numbers = #tpu.dot_dimension_numbers<[1], [0], [0], [1], [0, 0, 1, 1], [], []>} : vector<16x128xbf16>, vector<128x128xbf16>, vector<16x128xf32> -> vector<16x128xf32>
    %21 = arith.mulf %11, %20 : vector<16x128xf32>
    %c15_i32 = arith.constant 15 : i32
    %22 = tpu.dynamic_rotate %20 by %c15_i32 dim 0 : vector<16x128xf32>, i32 -> vector<16x128xf32>
    %23 = arith.mulf %14, %22 : vector<16x128xf32>
    %24 = arith.addf %21, %23 : vector<16x128xf32>
    %c1_i32 = arith.constant 1 : i32
    %25 = tpu.dynamic_rotate %20 by %c1_i32 dim 0 : vector<16x128xf32>, i32 -> vector<16x128xf32>
    %26 = arith.mulf %8, %25 : vector<16x128xf32>
    %27 = arith.addf %24, %26 : vector<16x128xf32>
    %c14_i32 = arith.constant 14 : i32
    %28 = tpu.dynamic_rotate %20 by %c14_i32 dim 0 : vector<16x128xf32>, i32 -> vector<16x128xf32>
    %29 = arith.mulf %17, %28 : vector<16x128xf32>
    %30 = arith.addf %27, %29 : vector<16x128xf32>
    %c2_i32 = arith.constant 2 : i32
    %31 = tpu.dynamic_rotate %20 by %c2_i32 dim 0 : vector<16x128xf32>, i32 -> vector<16x128xf32>
    %32 = arith.mulf %5, %31 : vector<16x128xf32>
    %33 = arith.addf %30, %32 : vector<16x128xf32>
    %34 = vector.extract_strided_slice %2 {offsets = [0, 0], sizes = [1, 128], strides = [1, 1]} : vector<6x128xf32> to vector<1x128xf32>
    %35 = vector.broadcast %34 : vector<1x128xf32> to vector<16x128xf32>
    %36 = arith.addf %33, %35 : vector<16x128xf32>
    %cst_7 = arith.constant 0.000000e+00 : f32
    %37 = vector.broadcast %cst_7 : f32 to vector<16x128xf32>
    %38 = arith.maximumf %36, %37 : vector<16x128xf32>
    %39 = arith.truncf %38 : vector<16x128xf32> to vector<16x128xbf16>
    %c0_8 = arith.constant 0 : index
    %c0_9 = arith.constant 0 : index
    %40 = vector.load %arg4[%c0_8, %c0_9] : memref<128x128xbf16, #tpu.memory_space<vmem>>, vector<128x128xbf16>
    %cst_10 = arith.constant dense<0.000000e+00> : vector<16x128xf32>
    %41 = tpu.matmul %39, %40, %cst_10 {dimension_numbers = #tpu.dot_dimension_numbers<[1], [0], [0], [1], [0, 0, 1, 1], [], []>} : vector<16x128xbf16>, vector<128x128xbf16>, vector<16x128xf32> -> vector<16x128xf32>
    %42 = arith.mulf %11, %41 : vector<16x128xf32>
    %c15_i32_11 = arith.constant 15 : i32
    %43 = tpu.dynamic_rotate %41 by %c15_i32_11 dim 0 : vector<16x128xf32>, i32 -> vector<16x128xf32>
    %44 = arith.mulf %14, %43 : vector<16x128xf32>
    %45 = arith.addf %42, %44 : vector<16x128xf32>
    %c1_i32_12 = arith.constant 1 : i32
    %46 = tpu.dynamic_rotate %41 by %c1_i32_12 dim 0 : vector<16x128xf32>, i32 -> vector<16x128xf32>
    %47 = arith.mulf %8, %46 : vector<16x128xf32>
    %48 = arith.addf %45, %47 : vector<16x128xf32>
    %c14_i32_13 = arith.constant 14 : i32
    %49 = tpu.dynamic_rotate %41 by %c14_i32_13 dim 0 : vector<16x128xf32>, i32 -> vector<16x128xf32>
    %50 = arith.mulf %17, %49 : vector<16x128xf32>
    %51 = arith.addf %48, %50 : vector<16x128xf32>
    %c2_i32_14 = arith.constant 2 : i32
    %52 = tpu.dynamic_rotate %41 by %c2_i32_14 dim 0 : vector<16x128xf32>, i32 -> vector<16x128xf32>
    %53 = arith.mulf %5, %52 : vector<16x128xf32>
    %54 = arith.addf %51, %53 : vector<16x128xf32>
    %55 = vector.extract_strided_slice %2 {offsets = [1, 0], sizes = [1, 128], strides = [1, 1]} : vector<6x128xf32> to vector<1x128xf32>
    %56 = vector.broadcast %55 : vector<1x128xf32> to vector<16x128xf32>
    %57 = arith.addf %54, %56 : vector<16x128xf32>
    %cst_15 = arith.constant 0.000000e+00 : f32
    %58 = vector.broadcast %cst_15 : f32 to vector<16x128xf32>
    %59 = arith.maximumf %57, %58 : vector<16x128xf32>
    %60 = arith.addf %38, %59 : vector<16x128xf32>
    %61 = vector.extract_strided_slice %2 {offsets = [4, 0], sizes = [1, 128], strides = [1, 1]} : vector<6x128xf32> to vector<1x128xf32>
    %62 = vector.extract_strided_slice %2 {offsets = [5, 0], sizes = [1, 1], strides = [1, 1]} : vector<6x128xf32> to vector<1x1xf32>
    %63 = vector.broadcast %61 : vector<1x128xf32> to vector<16x128xf32>
    %64 = arith.mulf %60, %63 : vector<16x128xf32>
    %cst_16 = arith.constant dense<0.000000e+00> : vector<16xf32>
    %65 = vector.multi_reduction <add>, %64, %cst_16 [1] : vector<16x128xf32> to vector<16xf32>
    %66 = vector.shape_cast %65 : vector<16xf32> to vector<16x1xf32>
    %67 = vector.broadcast %62 : vector<1x1xf32> to vector<16x1xf32>
    %68 = arith.addf %66, %67 : vector<16x1xf32>
    %69 = arith.negf %68 : vector<16x1xf32>
    %70 = math.exp %69 : vector<16x1xf32>
    %cst_17 = arith.constant 1.000000e+00 : f32
    %71 = vector.broadcast %cst_17 : f32 to vector<16x1xf32>
    %72 = arith.addf %71, %70 : vector<16x1xf32>
    %73 = arith.divf %71, %72 : vector<16x1xf32>
    %74 = arith.truncf %60 : vector<16x128xf32> to vector<16x128xbf16>
    %c0_18 = arith.constant 0 : index
    %c0_19 = arith.constant 0 : index
    %75 = vector.load %arg5[%c0_18, %c0_19] : memref<128x128xbf16, #tpu.memory_space<vmem>>, vector<128x128xbf16>
    %cst_20 = arith.constant dense<0.000000e+00> : vector<16x128xf32>
    %76 = tpu.matmul %74, %75, %cst_20 {dimension_numbers = #tpu.dot_dimension_numbers<[1], [0], [0], [1], [0, 0, 1, 1], [], []>} : vector<16x128xbf16>, vector<128x128xbf16>, vector<16x128xf32> -> vector<16x128xf32>
    %77 = vector.extract_strided_slice %2 {offsets = [2, 0], sizes = [1, 128], strides = [1, 1]} : vector<6x128xf32> to vector<1x128xf32>
    %78 = vector.broadcast %77 : vector<1x128xf32> to vector<16x128xf32>
    %79 = arith.addf %76, %78 : vector<16x128xf32>
    %cst_21 = arith.constant 0.000000e+00 : f32
    %80 = vector.broadcast %cst_21 : f32 to vector<16x128xf32>
    %81 = arith.maximumf %79, %80 : vector<16x128xf32>
    %82 = vector.broadcast %73 : vector<16x1xf32> to vector<16x128xf32>
    %83 = arith.mulf %82, %81 : vector<16x128xf32>
    %84 = vector.shape_cast %83 : vector<16x128xf32> to vector<1x16x128xf32>
    %cst_22 = arith.constant dense<0.000000e+00> : vector<1x128xf32>
    %85 = vector.multi_reduction <add>, %84, %cst_22 [1] : vector<1x16x128xf32> to vector<1x128xf32>
    %86 = arith.truncf %85 : vector<1x128xf32> to vector<1x128xbf16>
    %c0_23 = arith.constant 0 : index
    %c0_24 = arith.constant 0 : index
    %87 = vector.load %arg6[%c0_23, %c0_24] : memref<128x128xbf16, #tpu.memory_space<vmem>>, vector<128x128xbf16>
    %cst_25 = arith.constant dense<0.000000e+00> : vector<1x128xf32>
    %88 = tpu.matmul %86, %87, %cst_25 {dimension_numbers = #tpu.dot_dimension_numbers<[1], [0], [0], [1], [0, 0, 1, 1], [], []>} : vector<1x128xbf16>, vector<128x128xbf16>, vector<1x128xf32> -> vector<1x128xf32>
    %89 = vector.extract_strided_slice %2 {offsets = [3, 0], sizes = [1, 128], strides = [1, 1]} : vector<6x128xf32> to vector<1x128xf32>
    %90 = arith.addf %88, %89 : vector<1x128xf32>
    %91 = math.tanh %90 : vector<1x128xf32>
    %92 = arith.truncf %91 : vector<1x128xf32> to vector<1x128xbf16>
    %c0_26 = arith.constant 0 : index
    %c0_27 = arith.constant 0 : index
    %93 = vector.load %arg7[%c0_26, %c0_27] : memref<128x128xbf16, #tpu.memory_space<vmem>>, vector<128x128xbf16>
    %cst_28 = arith.constant dense<0.000000e+00> : vector<1x128xf32>
    %94 = tpu.matmul %92, %93, %cst_28 {dimension_numbers = #tpu.dot_dimension_numbers<[1], [0], [0], [1], [0, 0, 1, 1], [], []>} : vector<1x128xbf16>, vector<128x128xbf16>, vector<1x128xf32> -> vector<1x128xf32>
    %c0_29 = arith.constant 0 : index
    %c0_30 = arith.constant 0 : index
    %95 = vector.load %arg9[%c0_29, %c0_30] : memref<1x128xf32, #tpu.memory_space<vmem>>, vector<1x128xf32>
    %96 = arith.addf %94, %95 : vector<1x128xf32>
    %97 = arith.negf %96 : vector<1x128xf32>
    %98 = math.exp %97 : vector<1x128xf32>
    %cst_31 = arith.constant 1.000000e+00 : f32
    %99 = vector.broadcast %cst_31 : f32 to vector<1x128xf32>
    %100 = arith.addf %99, %98 : vector<1x128xf32>
    %101 = arith.divf %99, %100 : vector<1x128xf32>
    %c0_32 = arith.constant 0 : index
    %c0_33 = arith.constant 0 : index
    %c0_34 = arith.constant 0 : index
    %102 = vector.load %arg10[%c0_32, %c0_33, %c0_34] : memref<1x1x128xf32, #tpu.memory_space<vmem>>, vector<1x1x128xf32>
    %103 = vector.shape_cast %102 : vector<1x1x128xf32> to vector<1x128xf32>
    %104 = vector.shape_cast %101 : vector<1x128xf32> to vector<1x1x128xf32>
    tpu.vector_store %arg10[%c0_32, %c0_33, %c0_34], %104 {strides = array<i32>} : memref<1x1x128xf32, #tpu.memory_space<vmem>>, vector<1x1x128xf32>,
    return
  }
  func.func @transform_0(%arg0: i32) -> (i32, i32) {
    %c0_i32 = arith.constant 0 : i32
    %c0_i32_0 = arith.constant 0 : i32
    return %arg0, %c0_i32 : i32, i32
  }
  func.func @transform_1(%arg0: i32) -> (i32, i32) {
    %c0_i32 = arith.constant 0 : i32
    %c0_i32_0 = arith.constant 0 : i32
    %c0_i32_1 = arith.constant 0 : i32
    return %c0_i32, %c0_i32_0 : i32, i32
  }
  func.func @transform_2(%arg0: i32) -> (i32, i32) {
    %c0_i32 = arith.constant 0 : i32
    %c0_i32_0 = arith.constant 0 : i32
    %c0_i32_1 = arith.constant 0 : i32
    return %c0_i32, %c0_i32_0 : i32, i32
  }
  func.func @transform_3(%arg0: i32) -> (i32, i32) {
    %c0_i32 = arith.constant 0 : i32
    %c0_i32_0 = arith.constant 0 : i32
    %c0_i32_1 = arith.constant 0 : i32
    return %c0_i32, %c0_i32_0 : i32, i32
  }
  func.func @transform_4(%arg0: i32) -> (i32, i32) {
    %c0_i32 = arith.constant 0 : i32
    %c0_i32_0 = arith.constant 0 : i32
    %c0_i32_1 = arith.constant 0 : i32
    return %c0_i32, %c0_i32_0 : i32, i32
  }
  func.func @transform_5(%arg0: i32) -> (i32, i32) {
    %c0_i32 = arith.constant 0 : i32
    %c0_i32_0 = arith.constant 0 : i32
    %c0_i32_1 = arith.constant 0 : i32
    return %c0_i32, %c0_i32_0 : i32, i32
  }
  func.func @transform_6(%arg0: i32) -> (i32, i32) {
    %c0_i32 = arith.constant 0 : i32
    %c0_i32_0 = arith.constant 0 : i32
    %c0_i32_1 = arith.constant 0 : i32
    return %c0_i32, %c0_i32_0 : i32, i32
  }
  func.func @transform_7(%arg0: i32) -> (i32, i32) {
    %c0_i32 = arith.constant 0 : i32
    %c0_i32_0 = arith.constant 0 : i32
    %c0_i32_1 = arith.constant 0 : i32
    return %c0_i32, %c0_i32_0 : i32, i32
  }
  func.func @transform_8(%arg0: i32) -> (i32, i32) {
    %c0_i32 = arith.constant 0 : i32
    %c0_i32_0 = arith.constant 0 : i32
    %c0_i32_1 = arith.constant 0 : i32
    return %c0_i32, %c0_i32_0 : i32, i32
  }
  func.func @transform_9(%arg0: i32) -> (i32, i32, i32) {
    %c0_i32 = arith.constant 0 : i32
    %c0_i32_0 = arith.constant 0 : i32
    %c0_i32_1 = arith.constant 0 : i32
    return %arg0, %c0_i32, %c0_i32_0 : i32, i32, i32
  }
}

</mosaic_0001>

<llo_original>
// kernel: gnn_regvd_forward.1
$region0: #{gnn_regvd_forward.1}
  #allocation0 [shape = 'u32[]', space=smem, size = 0x4, offset = 0x4, fixed_abs, tag = 'smem constant byte address 0x4 - core index']
  #allocation1 [shape = 'u32[144,128]{1,0:T(1,128)}', space=vmem, size = 0x12000, scoped, tag = 'internal scratch']
  %s0 = inlined_call_operand.vmem [shape: f32[32,128], index: 0, kind: input, shape index: {}]
  %s1 = inlined_call_operand.vmem [shape: f32[16,5], index: 1, kind: input, shape index: {}]
  %s2 = inlined_call_operand.vmem [shape: bf16[128,128], index: 2, kind: input, shape index: {}]
  %s3 = inlined_call_operand.vmem [shape: bf16[128,128], index: 3, kind: input, shape index: {}]
  %s4 = inlined_call_operand.vmem [shape: bf16[128,128], index: 4, kind: input, shape index: {}]
  %s5 = inlined_call_operand.vmem [shape: bf16[128,128], index: 5, kind: input, shape index: {}]
  %s6 = inlined_call_operand.vmem [shape: bf16[128,128], index: 6, kind: input, shape index: {}]
  %s7 = inlined_call_operand.vmem [shape: f32[6,128], index: 7, kind: input, shape index: {}]
  %s8 = inlined_call_operand.vmem [shape: f32[1,128], index: 8, kind: input, shape index: {}]
  %s9 = inlined_call_operand.hbm [shape: f32[2,1,128], index: 9, kind: output, shape index: {}]
  %s10 = sld [smem:[#allocation0]]
  $region69: #{gnn_regvd_forward.1} parent=0
    _
  %s12 = ssub.s32 1, %s10
  %s13 = scalar_select 0, %s12, %s10
  $region1: #{gnn_regvd_forward.1} parent=0
    #allocation2 [shape = 'u8[1024]{0}', space=vmem, size = 0x400, scoped, tag = 'output window, operand 0']
    #allocation3 [shape = 's32[2]{0}', space=sflag, size = 0x8, scoped, tag = 'scoped memory for gnn_regvd_forward.1']
    %14 = vsyncpa [#allocation3], 0
    %s15 = scalar_lea.sflag [#allocation3], 1
    %16 = vsyncpa %s15, 0
    loop: start=0, step=1, limit=4
    $region2: #{gnn_regvd_forward.1} parent=1 // loop_pre_header
      _
    $region3: #{gnn_regvd_forward.1} parent=1 // loop_header
      %s18 = sphi 0, %s22
      %p19 = scmp.ge.s32.totalorder %s18, 4
      %s28 = sphi 0, %s30
      %s31 = sphi 0, %s28
      %s32 = sphi 0, %s31
      %s48 = sphi 0, %s32
      %s52 = sphi 0, %s52
      %s54 = sphi 0, %s52
      %s55 = sphi 0, %s54
      %s69 = sphi 0, %s55
      %s73 = sphi 0, %s73
      %s75 = sphi 0, %s73
      %s76 = sphi 0, %s75
      %s90 = sphi 0, %s76
      %s94 = sphi 0, %s94
      %s96 = sphi 0, %s94
      %s97 = sphi 0, %s96
      %s111 = sphi 0, %s97
      %s115 = sphi 0, %s115
      %s117 = sphi 0, %s115
      %s118 = sphi 0, %s117
      %s132 = sphi 0, %s118
      %s136 = sphi 0, %s136
      %s138 = sphi 0, %s136
      %s139 = sphi 0, %s138
      %s153 = sphi 0, %s139
      %s157 = sphi 0, %s157
      %s159 = sphi 0, %s157
      %s160 = sphi 0, %s159
      %s174 = sphi 0, %s160
      %s178 = sphi 0, %s178
      %s180 = sphi 0, %s178
      %s181 = sphi 0, %s180
      %s195 = sphi 0, %s181
      %s199 = sphi 0, %s199
      %s201 = sphi 0, %s199
      %s202 = sphi 0, %s201
      %s216 = sphi 0, %s202
      %s222 = sphi 0, %s224
      %s225 = sphi 0, %s222
      %s226 = sphi 0, %s225
      %s242 = sphi 0, %s226
    $region4: #{gnn_regvd_forward.1} parent=1 // loop_header_branch
      %21 = sbr.rel (%p19) target = $region8
    $region5: #{gnn_regvd_forward.1} parent=1 // loop_body
      %s23 = ssub.s32 %s18, 1
      %s24 = ssub.s32 %s18, 2
      %s25 = sadd.s32 %s18, 1
      %s26 = ssub.s32 %s18, %s25
      %p27 = scmp.eq.s32.totalorder %s26, 0
      %s29 = sadd.s32 %s28, 1
      %s30 = scalar_select %p27, %s28, %s29
      %p33 = pneg %p27
      %p34 = scmp.eq.s32.totalorder %s18, 1
      %p35 = por %p33, %p34
      %p36 = scmp.ne.s32.totalorder %s28, %s31
      %p37 = scmp.eq.s32.totalorder %s18, 0
      %p38 = por %p36, %p37
      %p39 = scmp.ne.s32.totalorder %s28, %s31
      %p40 = scmp.eq.s32.totalorder %s23, 1
      %p41 = por %p39, %p40
      %p42 = scmp.ne.s32.totalorder %s31, %s32
      %p43 = scmp.eq.s32.totalorder %s23, 0
      %p44 = por %p42, %p43
      %p45 = scmp.ne.s32.totalorder %s31, %s32
      %p46 = scmp.eq.s32.totalorder %s24, 1
      %p47 = por %p45, %p46
      %p49 = scmp.ne.s32.totalorder %s32, %s48
      %p50 = scmp.eq.s32.totalorder %s24, 0
      %p51 = por %p49, %p50
      %s53 = sadd.s32 %s52, 1
      %p56 = scmp.eq.s32.totalorder %s18, 1
      %p57 = scmp.ne.s32.totalorder %s52, %s54
      %p58 = scmp.eq.s32.totalorder %s18, 0
      %p59 = por %p57, %p58
      %p60 = scmp.ne.s32.totalorder %s52, %s54
      %p61 = scmp.eq.s32.totalorder %s23, 1
      %p62 = por %p60, %p61
      %p63 = scmp.ne.s32.totalorder %s54, %s55
      %p64 = scmp.eq.s32.totalorder %s23, 0
      %p65 = por %p63, %p64
      %p66 = scmp.ne.s32.totalorder %s54, %s55
      %p67 = scmp.eq.s32.totalorder %s24, 1
      %p68 = por %p66, %p67
      %p70 = scmp.ne.s32.totalorder %s55, %s69
      %p71 = scmp.eq.s32.totalorder %s24, 0
      %p72 = por %p70, %p71
      %s74 = sadd.s32 %s73, 1
      %p77 = scmp.eq.s32.totalorder %s18, 1
      %p78 = scmp.ne.s32.totalorder %s73, %s75
      %p79 = scmp.eq.s32.totalorder %s18, 0
      %p80 = por %p78, %p79
      %p81 = scmp.ne.s32.totalorder %s73, %s75
      %p82 = scmp.eq.s32.totalorder %s23, 1
      %p83 = por %p81, %p82
      %p84 = scmp.ne.s32.totalorder %s75, %s76
      %p85 = scmp.eq.s32.totalorder %s23, 0
      %p86 = por %p84, %p85
      %p87 = scmp.ne.s32.totalorder %s75, %s76
      %p88 = scmp.eq.s32.totalorder %s24, 1
      %p89 = por %p87, %p88
      %p91 = scmp.ne.s32.totalorder %s76, %s90
      %p92 = scmp.eq.s32.totalorder %s24, 0
      %p93 = por %p91, %p92
      %s95 = sadd.s32 %s94, 1
      %p98 = scmp.eq.s32.totalorder %s18, 1
      %p99 = scmp.ne.s32.totalorder %s94, %s96
      %p100 = scmp.eq.s32.totalorder %s18, 0
      %p101 = por %p99, %p100
      %p102 = scmp.ne.s32.totalorder %s94, %s96
      %p103 = scmp.eq.s32.totalorder %s23, 1
      %p104 = por %p102, %p103
      %p105 = scmp.ne.s32.totalorder %s96, %s97
      %p106 = scmp.eq.s32.totalorder %s23, 0
      %p107 = por %p105, %p106
      %p108 = scmp.ne.s32.totalorder %s96, %s97
      %p109 = scmp.eq.s32.totalorder %s24, 1
      %p110 = por %p108, %p109
      %p112 = scmp.ne.s32.totalorder %s97, %s111
      %p113 = scmp.eq.s32.totalorder %s24, 0
      %p114 = por %p112, %p113
      %s116 = sadd.s32 %s115, 1
      %p119 = scmp.eq.s32.totalorder %s18, 1
      %p120 = scmp.ne.s32.totalorder %s115, %s117
      %p121 = scmp.eq.s32.totalorder %s18, 0
      %p122 = por %p120, %p121
      %p123 = scmp.ne.s32.totalorder %s115, %s117
      %p124 = scmp.eq.s32.totalorder %s23, 1
      %p125 = por %p123, %p124
      %p126 = scmp.ne.s32.totalorder %s117, %s118
      %p127 = scmp.eq.s32.totalorder %s23, 0
      %p128 = por %p126, %p127
      %p129 = scmp.ne.s32.totalorder %s117, %s118
      %p130 = scmp.eq.s32.totalorder %s24, 1
      %p131 = por %p129, %p130
      %p133 = scmp.ne.s32.totalorder %s118, %s132
      %p134 = scmp.eq.s32.totalorder %s24, 0
      %p135 = por %p133, %p134
      %s137 = sadd.s32 %s136, 1
      %p140 = scmp.eq.s32.totalorder %s18, 1
      %p141 = scmp.ne.s32.totalorder %s136, %s138
      %p142 = scmp.eq.s32.totalorder %s18, 0
      %p143 = por %p141, %p142
      %p144 = scmp.ne.s32.totalorder %s136, %s138
      %p145 = scmp.eq.s32.totalorder %s23, 1
      %p146 = por %p144, %p145
      %p147 = scmp.ne.s32.totalorder %s138, %s139
      %p148 = scmp.eq.s32.totalorder %s23, 0
      %p149 = por %p147, %p148
      %p150 = scmp.ne.s32.totalorder %s138, %s139
      %p151 = scmp.eq.s32.totalorder %s24, 1
      %p152 = por %p150, %p151
      %p154 = scmp.ne.s32.totalorder %s139, %s153
      %p155 = scmp.eq.s32.totalorder %s24, 0
      %p156 = por %p154, %p155
      %s158 = sadd.s32 %s157, 1
      %p161 = scmp.eq.s32.totalorder %s18, 1
      %p162 = scmp.ne.s32.totalorder %s157, %s159
      %p163 = scmp.eq.s32.totalorder %s18, 0
      %p164 = por %p162, %p163
      %p165 = scmp.ne.s32.totalorder %s157, %s159
      %p166 = scmp.eq.s32.totalorder %s23, 1
      %p167 = por %p165, %p166
      %p168 = scmp.ne.s32.totalorder %s159, %s160
      %p169 = scmp.eq.s32.totalorder %s23, 0
      %p170 = por %p168, %p169
      %p171 = scmp.ne.s32.totalorder %s159, %s160
      %p172 = scmp.eq.s32.totalorder %s24, 1
      %p173 = por %p171, %p172
      %p175 = scmp.ne.s32.totalorder %s160, %s174
      %p176 = scmp.eq.s32.totalorder %s24, 0
      %p177 = por %p175, %p176
      %s179 = sadd.s32 %s178, 1
      %p182 = scmp.eq.s32.totalorder %s18, 1
      %p183 = scmp.ne.s32.totalorder %s178, %s180
      %p184 = scmp.eq.s32.totalorder %s18, 0
      %p185 = por %p183, %p184
      %p186 = scmp.ne.s32.totalorder %s178, %s180
      %p187 = scmp.eq.s32.totalorder %s23, 1
      %p188 = por %p186, %p187
      %p189 = scmp.ne.s32.totalorder %s180, %s181
      %p190 = scmp.eq.s32.totalorder %s23, 0
      %p191 = por %p189, %p190
      %p192 = scmp.ne.s32.totalorder %s180, %s181
      %p193 = scmp.eq.s32.totalorder %s24, 1
      %p194 = por %p192, %p193
      %p196 = scmp.ne.s32.totalorder %s181, %s195
      %p197 = scmp.eq.s32.totalorder %s24, 0
      %p198 = por %p196, %p197
      %s200 = sadd.s32 %s199, 1
      %p203 = scmp.eq.s32.totalorder %s18, 1
      %p204 = scmp.ne.s32.totalorder %s199, %s201
      %p205 = scmp.eq.s32.totalorder %s18, 0
      %p206 = por %p204, %p205
      %p207 = scmp.ne.s32.totalorder %s199, %s201
      %p208 = scmp.eq.s32.totalorder %s23, 1
      %p209 = por %p207, %p208
      %p210 = scmp.ne.s32.totalorder %s201, %s202
      %p211 = scmp.eq.s32.totalorder %s23, 0
      %p212 = por %p210, %p211
      %p213 = scmp.ne.s32.totalorder %s201, %s202
      %p214 = scmp.eq.s32.totalorder %s24, 1
      %p215 = por %p213, %p214
      %p217 = scmp.ne.s32.totalorder %s202, %s216
      %p218 = scmp.eq.s32.totalorder %s24, 0
      %p219 = por %p217, %p218
      %s220 = ssub.s32 %s18, %s25
      %p221 = scmp.eq.s32.totalorder %s220, 0
      %s223 = sadd.s32 %s222, 1
      %s224 = scalar_select %p221, %s222, %s223
      %p227 = pneg %p221
      %p228 = scmp.eq.s32.totalorder %s18, 1
      %p229 = por %p227, %p228
      %p230 = scmp.ne.s32.totalorder %s222, %s225
      %p231 = scmp.eq.s32.totalorder %s18, 0
      %p232 = por %p230, %p231
      %p233 = scmp.ne.s32.totalorder %s222, %s225
      %p234 = scmp.eq.s32.totalorder %s23, 1
      %p235 = por %p233, %p234
      %p236 = scmp.ne.s32.totalorder %s225, %s226
      %p237 = scmp.eq.s32.totalorder %s23, 0
      %p238 = por %p236, %p237
      %p239 = scmp.ne.s32.totalorder %s225, %s226
      %p240 = scmp.eq.s32.totalorder %s24, 1
      %p241 = por %p239, %p240
      %p243 = scmp.ne.s32.totalorder %s226, %s242
      %p244 = scmp.eq.s32.totalorder %s24, 0
      %p245 = por %p243, %p244
      %p246 = scmp.le.s32.totalorder 1, %s18
      %p247 = scmp.lt.s32.totalorder %s18, 3
      %p248 = pnand %p246, %p247
      %p249 = pneg %p248
      // Predicated region
      $region9: #{gnn_regvd_forward.1} parent=5 // pred_check
        _
      $region10: #{gnn_regvd_forward.1} parent=5 // pred_check_branch
        %251 = sbr.rel (%p248) target = $region12
      $region11: #{gnn_regvd_forward.1} parent=5 // pred_region
        %s252 = ssub.s32 %s18, 1
        // Predicated region
        $region13: #{gnn_regvd_forward.1} parent=11 // pred_check
          %p253 = pneg %p65
        $region14: #{gnn_regvd_forward.1} parent=11 // pred_check_branch
          %255 = sbr.rel (%p253) target = $region16
        $region15: #{gnn_regvd_forward.1} parent=11 // pred_region
          _
        $region16: #{gnn_regvd_forward.1} parent=11 // pred_fallthru
          _
        // Predicated region
        $region17: #{gnn_regvd_forward.1} parent=11 // pred_check
          %p256 = pneg %p86
        $region18: #{gnn_regvd_forward.1} parent=11 // pred_check_branch
          %258 = sbr.rel (%p256) target = $region20
        $region19: #{gnn_regvd_forward.1} parent=11 // pred_region
          _
        $region20: #{gnn_regvd_forward.1} parent=11 // pred_fallthru
          _
        // Predicated region
        $region21: #{gnn_regvd_forward.1} parent=11 // pred_check
          %p259 = pneg %p107
        $region22: #{gnn_regvd_forward.1} parent=11 // pred_check_branch
          %261 = sbr.rel (%p259) target = $region24
        $region23: #{gnn_regvd_forward.1} parent=11 // pred_region
          _
        $region24: #{gnn_regvd_forward.1} parent=11 // pred_fallthru
          _
        // Predicated region
        $region25: #{gnn_regvd_forward.1} parent=11 // pred_check
          %p262 = pneg %p128
        $region26: #{gnn_regvd_forward.1} parent=11 // pred_check_branch
          %264 = sbr.rel (%p262) target = $region28
        $region27: #{gnn_regvd_forward.1} parent=11 // pred_region
          _
        $region28: #{gnn_regvd_forward.1} parent=11 // pred_fallthru
          _
        // Predicated region
        $region29: #{gnn_regvd_forward.1} parent=11 // pred_check
          %p265 = pneg %p149
        $region30: #{gnn_regvd_forward.1} parent=11 // pred_check_branch
          %267 = sbr.rel (%p265) target = $region32
        $region31: #{gnn_regvd_forward.1} parent=11 // pred_region
          _
        $region32: #{gnn_regvd_forward.1} parent=11 // pred_fallthru
          _
        // Predicated region
        $region33: #{gnn_regvd_forward.1} parent=11 // pred_check
          %p268 = pneg %p170
        $region34: #{gnn_regvd_forward.1} parent=11 // pred_check_branch
          %270 = sbr.rel (%p268) target = $region36
        $region35: #{gnn_regvd_forward.1} parent=11 // pred_region
          _
        $region36: #{gnn_regvd_forward.1} parent=11 // pred_fallthru
          _
        // Predicated region
        $region37: #{gnn_regvd_forward.1} parent=11 // pred_check
          %p271 = pneg %p191
        $region38: #{gnn_regvd_forward.1} parent=11 // pred_check_branch
          %273 = sbr.rel (%p271) target = $region40
        $region39: #{gnn_regvd_forward.1} parent=11 // pred_region
          _
        $region40: #{gnn_regvd_forward.1} parent=11 // pred_fallthru
          _
        // Predicated region
        $region41: #{gnn_regvd_forward.1} parent=11 // pred_check
          %p274 = pneg %p212
        $region42: #{gnn_regvd_forward.1} parent=11 // pred_check_branch
          %276 = sbr.rel (%p274) target = $region44
        $region43: #{gnn_regvd_forward.1} parent=11 // pred_region
          _
        $region44: #{gnn_regvd_forward.1} parent=11 // pred_fallthru
          _
      $region12: #{gnn_regvd_forward.1} parent=5 // pred_fallthru
        _
      %p277 = scmp.lt.s32.totalorder %s18, 2
      // Predicated region
      $region45: #{gnn_regvd_forward.1} parent=5 // pred_check
        %p278 = pneg %p277
      $region46: #{gnn_regvd_forward.1} parent=5 // pred_check_branch
        %280 = sbr.rel (%p278) target = $region48
      $region47: #{gnn_regvd_forward.1} parent=5 // pred_region
        // Predicated region
        $region49: #{gnn_regvd_forward.1} parent=47 // pred_check
          %p281 = pneg %p38
        $region50: #{gnn_regvd_forward.1} parent=47 // pred_check_branch
          %283 = sbr.rel (%p281) target = $region52
        $region51: #{gnn_regvd_forward.1} parent=47 // pred_region
          %s284 = smul.u32 2, %s18
          %p285 = scmp.lt.s32.totalorder %s284, 3
          %s286 = scalar_select %p285, %s284, 3
          %s287 = smul.addr %s286, 8
          %s288 = scalar_lea.vmem %s0, %s287
          %s289 = smul.u32 2, %s18
        $region52: #{gnn_regvd_forward.1} parent=47 // pred_fallthru
          _
      $region48: #{gnn_regvd_forward.1} parent=5 // pred_fallthru
        _
      %p290 = scmp.le.s32.totalorder 1, %s18
      %p291 = scmp.lt.s32.totalorder %s18, 3
      %p292 = pnand %p290, %p291
      %p293 = pneg %p292
      // Predicated region
      $region53: #{gnn_regvd_forward.1} parent=5 // pred_check
        _
      $region54: #{gnn_regvd_forward.1} parent=5 // pred_check_branch
        %295 = sbr.rel (%p292) target = $region56
      $region55: #{gnn_regvd_forward.1} parent=5 // pred_region
        %s296 = ssub.s32 %s18, 1
        %s297 = smul.u32 2, %s23
        %p298 = scmp.lt.s32.totalorder %s297, 3
        %s299 = scalar_select %p298, %s297, 3
        %s300 = smul.addr %s299, 8
        %s301 = scalar_lea.vmem %s0, %s300
        %p302 = pneg %p44
        %p303 = pneg %p41
        %p304 = pneg %p65
        %p305 = pneg %p62
        %p306 = pneg %p86
        %p307 = pneg %p83
        %p308 = pneg %p107
        %p309 = pneg %p104
        %p310 = pneg %p128
        %p311 = pneg %p125
        %p312 = pneg %p149
        %p313 = pneg %p146
        %p314 = pneg %p170
        %p315 = pneg %p167
        %p316 = pneg %p191
        %p317 = pneg %p188
        %p318 = pneg %p212
        %p319 = pneg %p209
        %p320 = pneg %p238
        %p321 = pneg %p235
        %s322 = sand.u32 %s225, 1
        %s323 = scalar_lea.sflag [#allocation3], %s322
        %s324 = sand.u32 %s225, 1
        %s325 = scalar_lea.vmem [#allocation2], %s324
        %s326 = smul.u32 2, %s23
        %p327 = scmp.lt.s32.totalorder %s326, 3
        %s328 = scalar_select %p327, %s326, 3
        %s329 = smul.addr %s328, 8
        %s330 = scalar_lea.vmem %s0, %s329
        %s331 = smul.u32 2, %s23
        %v333 = vld [vmem:[%s330] sm:$0xff]
        %v334 = vld [vmem:[%s330 + $0x8] sm:$0xff]
        %v335 = vld [vmem:[%s1] sm:$0xff]
        %v336 = vld [vmem:[%s1 + $0x8] sm:$0xff]
        %v337 = vld [vmem:[%s7] sm:$0x3f]
        %339 = vset.pattern.permute.xlu0 0
        %340 = vperm.xlu0 %339, %v335
        %v341 = vpop.permute.xlu0 %340
        %344 = vset.pattern.permute.xlu0 0
        %345 = vperm.xlu0 %344, %v336
        %v346 = vpop.permute.xlu0 %345
        %348 = vset.pattern.permute.xlu0 1
        %349 = vperm.xlu0 %348, %v335
        %v350 = vpop.permute.xlu0 %349
        %352 = vset.pattern.permute.xlu0 1
        %353 = vperm.xlu0 %352, %v336
        %v354 = vpop.permute.xlu0 %353
        %356 = vset.pattern.permute.xlu0 2
        %357 = vperm.xlu0 %356, %v335
        %v358 = vpop.permute.xlu0 %357
        %360 = vset.pattern.permute.xlu0 2
        %361 = vperm.xlu0 %360, %v336
        %v362 = vpop.permute.xlu0 %361
        %364 = vset.pattern.permute.xlu0 3
        %365 = vperm.xlu0 %364, %v335
        %v366 = vpop.permute.xlu0 %365
        %368 = vset.pattern.permute.xlu0 3
        %369 = vperm.xlu0 %368, %v336
        %v370 = vpop.permute.xlu0 %369
        %372 = vset.pattern.permute.xlu0 4
        %373 = vperm.xlu0 %372, %v335
        %v374 = vpop.permute.xlu0 %373
        %376 = vset.pattern.permute.xlu0 4
        %377 = vperm.xlu0 %376, %v336
        %v378 = vpop.permute.xlu0 %377
        %v380 = vpack.c.bf16 %v334, %v333
        %v381 = vld [vmem:[%s2] sm:$0xf]
        %v382 = vld [vmem:[%s2 + $0x4] sm:$0xf]
        %v383 = vld [vmem:[%s2 + $0x8] sm:$0xf]
        %v384 = vld [vmem:[%s2 + $0xc] sm:$0xf]
        %v385 = vld [vmem:[%s2 + $0x10] sm:$0xf]
        %v386 = vld [vmem:[%s2 + $0x14] sm:$0xf]
        %v387 = vld [vmem:[%s2 + $0x18] sm:$0xf]
        %v388 = vld [vmem:[%s2 + $0x1c] sm:$0xf]
        %v389 = vld [vmem:[%s2 + $0x20] sm:$0xf]
        %v390 = vld [vmem:[%s2 + $0x24] sm:$0xf]
        %v391 = vld [vmem:[%s2 + $0x28] sm:$0xf]
        %v392 = vld [vmem:[%s2 + $0x2c] sm:$0xf]
        %v393 = vld [vmem:[%s2 + $0x30] sm:$0xf]
        %v394 = vld [vmem:[%s2 + $0x34] sm:$0xf]
        %v395 = vld [vmem:[%s2 + $0x38] sm:$0xf]
        %v396 = vld [vmem:[%s2 + $0x3c] sm:$0xf]
        %v413 = vunpack.c.l.b16 %v381
        %v414 = vunpack.c.l.b16 %v382
        %v415 = vunpack.c.l.b16 %v383
        %v416 = vunpack.c.l.b16 %v384
        %v417 = vunpack.c.l.b16 %v385
        %v418 = vunpack.c.l.b16 %v386
        %v419 = vunpack.c.l.b16 %v387
        %v420 = vunpack.c.l.b16 %v388
        %v421 = vunpack.c.l.b16 %v389
        %v422 = vunpack.c.l.b16 %v390
        %v423 = vunpack.c.l.b16 %v391
        %v424 = vunpack.c.l.b16 %v392
        %v425 = vunpack.c.l.b16 %v393
        %v426 = vunpack.c.l.b16 %v394
        %v427 = vunpack.c.l.b16 %v395
        %v428 = vunpack.c.l.b16 %v396
        %v429 = vpack.c.b16 %v414, %v413
        %v430 = vpack.c.b16 %v416, %v415
        %v431 = vpack.c.b16 %v418, %v417
        %v432 = vpack.c.b16 %v420, %v419
        %v433 = vpack.c.b16 %v422, %v421
        %v434 = vpack.c.b16 %v424, %v423
        %v435 = vpack.c.b16 %v426, %v425
        %v436 = vpack.c.b16 %v428, %v427
        %445 = vmatprep.subr.bf16.mxu0 0
        %446 = vmatpush1.bf16.msra.mxu0 %v429
        %447 = vmatprep.subr.bf16.mxu0 0
        %448 = vmatpush1.bf16.msra.mxu0 %v430
        %449 = vmatprep.subr.bf16.mxu0 0
        %450 = vmatpush1.bf16.msra.mxu0 %v431
        %451 = vmatprep.subr.bf16.mxu0 0
        %452 = vmatpush1.bf16.msra.mxu0 %v432
        %453 = vmatprep.subr.bf16.mxu0 0
        %454 = vmatpush1.bf16.msra.mxu0 %v433
        %455 = vmatprep.subr.bf16.mxu0 0
        %456 = vmatpush1.bf16.msra.mxu0 %v434
        %457 = vmatprep.subr.bf16.mxu0 0
        %458 = vmatpush1.bf16.msra.mxu0 %v435
        %459 = vmatprep.subr.bf16.mxu0 0
        %460 = vmatpush1.bf16.msra.mxu0 %v436
        %461 = vmatprep.subr.bf16.mxu0 0
        %462 = vmatpush1.bf16.msra.mxu0 0
        %463 = vmatprep.subr.bf16.mxu0 0
        %464 = vmatpush1.bf16.msra.mxu0 0
        %465 = vmatprep.subr.bf16.mxu0 0
        %466 = vmatpush1.bf16.msra.mxu0 0
        %467 = vmatprep.subr.bf16.mxu0 0
        %468 = vmatpush1.bf16.msra.mxu0 0
        %469 = vmatprep.subr.bf16.mxu0 0
        %470 = vmatpush1.bf16.msra.mxu0 0
        %471 = vmatprep.subr.bf16.mxu0 0
        %472 = vmatpush1.bf16.msra.mxu0 0
        %473 = vmatprep.subr.bf16.mxu0 0
        %474 = vmatpush1.bf16.msra.mxu0 0
        %475 = vmatprep.subr.bf16.mxu0 0
        %476 = vmatpush1.bf16.msra.mxu0 0
        %477 = vmatprep.mubr.bf16.mxu0 0
        %478 = vmatmul.mubr.bf16.gmra.mrb[0].mxu0 %v380
        %v479 = vpop.f32.mrb[0].mxu0
        %v480 = vadd.f32 0.0, %v479
        %v481 = vpop.f32.mrb[0].mxu0
        %v482 = vpop.f32.mrb[0].mxu0
        %v483 = vadd.f32 0.0, %v482
        %v484 = vpop.f32.mrb[0].mxu0
        %485 = vdwg.mxu0
        %v486 = vmul.f32 %v358, %v480
        %v487 = vmul.f32 %v362, %v483
        %v488 = vrot.slane %v480, 1
        %v489 = vrot.slane %v483, 1
        %v490 = vlaneseq
        %v491 = vshrl.u32 %v490, 7
        %vm492 = vcmp.lt.s32.totalorder %v491, 7
        %v493 = vsel %vm492, %v488, %v489
        %v494 = vsel %vm492, %v489, %v488
        %v495 = vmul.f32 %v366, %v493
        %v496 = vmul.f32 %v370, %v494
        %v497 = vadd.f32 %v486, %v495
        %v498 = vadd.f32 %v487, %v496
        %v499 = vrot.slane %v480, 7
        %v500 = vrot.slane %v483, 7
        %vm501 = vcmp.lt.s32.totalorder %v491, 1
        %v502 = vsel %vm501, %v499, %v500
        %v503 = vsel %vm501, %v500, %v499
        %v504 = vmul.f32 %v350, %v503
        %v505 = vmul.f32 %v354, %v502
        %v506 = vadd.f32 %v497, %v504
        %v507 = vadd.f32 %v498, %v505
        %v508 = vrot.slane %v480, 2
        %v509 = vrot.slane %v483, 2
        %vm510 = vcmp.lt.s32.totalorder %v491, 6
        %v511 = vsel %vm510, %v508, %v509
        %v512 = vsel %vm510, %v509, %v508
        %v513 = vmul.f32 %v374, %v511
        %v514 = vmul.f32 %v378, %v512
        %v515 = vadd.f32 %v506, %v513
        %v516 = vadd.f32 %v507, %v514
        %v517 = vrot.slane %v480, 6
        %v518 = vrot.slane %v483, 6
        %vm519 = vcmp.lt.s32.totalorder %v491, 2
        %v520 = vsel %vm519, %v517, %v518
        %v521 = vsel %vm519, %v518, %v517
        %v522 = vmul.f32 %v341, %v521
        %v523 = vmul.f32 %v346, %v520
        %v524 = vadd.f32 %v515, %v522
        %v525 = vadd.f32 %v516, %v523
        %v526 = vlaneseq
        %v527 = vshrl.u32 %v526, 7
        %v528 = vsub.s32 0, %v527
        %v529 = vrot.slane %v337, %v528
        %v530 = vadd.f32 %v524, %v529
        %v531 = vadd.f32 %v525, %v529
        %v532 = vmax.f32 %v530, 0.0
        %v533 = vmax.f32 %v531, 0.0
        %v534 = vpack.c.bf16 %v533, %v532
        %v535 = vld [vmem:[%s3] sm:$0xf]
        %v536 = vld [vmem:[%s3 + $0x4] sm:$0xf]
        %v537 = vld [vmem:[%s3 + $0x8] sm:$0xf]
        %v538 = vld [vmem:[%s3 + $0xc] sm:$0xf]
        %v539 = vld [vmem:[%s3 + $0x10] sm:$0xf]
        %v540 = vld [vmem:[%s3 + $0x14] sm:$0xf]
        %v541 = vld [vmem:[%s3 + $0x18] sm:$0xf]
        %v542 = vld [vmem:[%s3 + $0x1c] sm:$0xf]
        %v543 = vld [vmem:[%s3 + $0x20] sm:$0xf]
        %v544 = vld [vmem:[%s3 + $0x24] sm:$0xf]
        %v545 = vld [vmem:[%s3 + $0x28] sm:$0xf]
        %v546 = vld [vmem:[%s3 + $0x2c] sm:$0xf]
        %v547 = vld [vmem:[%s3 + $0x30] sm:$0xf]
        %v548 = vld [vmem:[%s3 + $0x34] sm:$0xf]
        %v549 = vld [vmem:[%s3 + $0x38] sm:$0xf]
        %v550 = vld [vmem:[%s3 + $0x3c] sm:$0xf]
        %v567 = vunpack.c.l.b16 %v535
        %v568 = vunpack.c.l.b16 %v536
        %v569 = vunpack.c.l.b16 %v537
        %v570 = vunpack.c.l.b16 %v538
        %v571 = vunpack.c.l.b16 %v539
        %v572 = vunpack.c.l.b16 %v540
        %v573 = vunpack.c.l.b16 %v541
        %v574 = vunpack.c.l.b16 %v542
        %v575 = vunpack.c.l.b16 %v543
        %v576 = vunpack.c.l.b16 %v544
        %v577 = vunpack.c.l.b16 %v545
        %v578 = vunpack.c.l.b16 %v546
        %v579 = vunpack.c.l.b16 %v547
        %v580 = vunpack.c.l.b16 %v548
        %v581 = vunpack.c.l.b16 %v549
        %v582 = vunpack.c.l.b16 %v550
        %v583 = vpack.c.b16 %v568, %v567
        %v584 = vpack.c.b16 %v570, %v569
        %v585 = vpack.c.b16 %v572, %v571
        %v586 = vpack.c.b16 %v574, %v573
        %v587 = vpack.c.b16 %v576, %v575
        %v588 = vpack.c.b16 %v578, %v577
        %v589 = vpack.c.b16 %v580, %v579
        %v590 = vpack.c.b16 %v582, %v581
        %599 = vmatprep.subr.bf16.mxu0 0
        %600 = vmatpush1.bf16.msra.mxu0 %v583
        %601 = vmatprep.subr.bf16.mxu0 0
        %602 = vmatpush1.bf16.msra.mxu0 %v584
        %603 = vmatprep.subr.bf16.mxu0 0
        %604 = vmatpush1.bf16.msra.mxu0 %v585
        %605 = vmatprep.subr.bf16.mxu0 0
        %606 = vmatpush1.bf16.msra.mxu0 %v586
        %607 = vmatprep.subr.bf16.mxu0 0
        %608 = vmatpush1.bf16.msra.mxu0 %v587
        %609 = vmatprep.subr.bf16.mxu0 0
        %610 = vmatpush1.bf16.msra.mxu0 %v588
        %611 = vmatprep.subr.bf16.mxu0 0
        %612 = vmatpush1.bf16.msra.mxu0 %v589
        %613 = vmatprep.subr.bf16.mxu0 0
        %614 = vmatpush1.bf16.msra.mxu0 %v590
        %615 = vmatprep.subr.bf16.mxu0 0
        %616 = vmatpush1.bf16.msra.mxu0 0
        %617 = vmatprep.subr.bf16.mxu0 0
        %618 = vmatpush1.bf16.msra.mxu0 0
        %619 = vmatprep.subr.bf16.mxu0 0
        %620 = vmatpush1.bf16.msra.mxu0 0
        %621 = vmatprep.subr.bf16.mxu0 0
        %622 = vmatpush1.bf16.msra.mxu0 0
        %623 = vmatprep.subr.bf16.mxu0 0
        %624 = vmatpush1.bf16.msra.mxu0 0
        %625 = vmatprep.subr.bf16.mxu0 0
        %626 = vmatpush1.bf16.msra.mxu0 0
        %627 = vmatprep.subr.bf16.mxu0 0
        %628 = vmatpush1.bf16.msra.mxu0 0
        %629 = vmatprep.subr.bf16.mxu0 0
        %630 = vmatpush1.bf16.msra.mxu0 0
        %631 = vmatprep.mubr.bf16.mxu0 0
        %632 = vmatmul.mubr.bf16.gmra.mrb[0].mxu0 %v534
        %v633 = vpop.f32.mrb[0].mxu0
        %v634 = vadd.f32 0.0, %v633
        %v635 = vpop.f32.mrb[0].mxu0
        %v636 = vpop.f32.mrb[0].mxu0
        %v637 = vadd.f32 0.0, %v636
        %v638 = vpop.f32.mrb[0].mxu0
        %639 = vdwg.mxu0
        %v640 = vmul.f32 %v358, %v634
        %v641 = vmul.f32 %v362, %v637
        %v642 = vrot.slane %v634, 1
        %v643 = vrot.slane %v637, 1
        %v644 = vsel %vm492, %v642, %v643
        %v645 = vsel %vm492, %v643, %v642
        %v646 = vmul.f32 %v366, %v644
        %v647 = vmul.f32 %v370, %v645
        %v648 = vadd.f32 %v640, %v646
        %v649 = vadd.f32 %v641, %v647
        %v650 = vrot.slane %v634, 7
        %v651 = vrot.slane %v637, 7
        %v652 = vsel %vm501, %v650, %v651
        %v653 = vsel %vm501, %v651, %v650
        %v654 = vmul.f32 %v350, %v653
        %v655 = vmul.f32 %v354, %v652
        %v656 = vadd.f32 %v648, %v654
        %v657 = vadd.f32 %v649, %v655
        %v658 = vrot.slane %v634, 2
        %v659 = vrot.slane %v637, 2
        %v660 = vsel %vm510, %v658, %v659
        %v661 = vsel %vm510, %v659, %v658
        %v662 = vmul.f32 %v374, %v660
        %v663 = vmul.f32 %v378, %v661
        %v664 = vadd.f32 %v656, %v662
        %v665 = vadd.f32 %v657, %v663
        %v666 = vrot.slane %v634, 6
        %v667 = vrot.slane %v637, 6
        %v668 = vsel %vm519, %v666, %v667
        %v669 = vsel %vm519, %v667, %v666
        %v670 = vmul.f32 %v341, %v669
        %v671 = vmul.f32 %v346, %v668
        %v672 = vadd.f32 %v664, %v670
        %v673 = vadd.f32 %v665, %v671
        %v674 = vlaneseq
        %v675 = vshrl.u32 %v674, 7
        %v676 = vsub.s32 1, %v675
        %v677 = vrot.slane %v337, %v676
        %v678 = vadd.f32 %v672, %v677
        %v679 = vadd.f32 %v673, %v677
        %v680 = vmax.f32 %v678, 0.0
        %v681 = vmax.f32 %v679, 0.0
        %v682 = vadd.f32 %v532, %v680
        %v683 = vadd.f32 %v533, %v681
        %v684 = vlaneseq
        %v685 = vshrl.u32 %v684, 7
        %v686 = vsub.s32 4, %v685
        %v687 = vrot.slane %v337, %v686
        %v688 = vmul.f32 %v682, %v687
        %v689 = vmul.f32 %v683, %v687
        %690 = vadd.xlane.f32.xlu0 %v688
        %v691 = vpop.xlane.xlu0 %690
        %692 = vadd.xlane.f32.xlu0 %v689
        %v693 = vpop.xlane.xlu0 %692
        %v694 = vlaneseq
        %v695 = vshrl.u32 %v694, 7
        %v696 = vsub.s32 5, %v695
        %v697 = vrot.slane %v337, %v696
        %v698 = vadd.f32 %v691, %v697
        %v699 = vadd.f32 %v693, %v697
        %v700 = vxor.u32 %v698, 2147483648
        %v701 = vxor.u32 %v699, 2147483648
        %v702 = vmul.f32 %v700, 1.442695
        %v703 = vpow.pop %v702
        %v704 = vmul.f32 %v701, 1.442695
        %v705 = vpow.pop %v704
        %v706 = vadd.f32 %v703, 1.0
        %v707 = vadd.f32 %v705, 1.0
        %v708 = vrcp.pop %v706
        %v709 = vmul.f32 1.0, %v708
        %v710 = vrcp.pop %v707
        %v711 = vmul.f32 1.0, %v710
        %v712 = vpack.c.bf16 %v683, %v682
        %v713 = vld [vmem:[%s4] sm:$0xf]
        %v714 = vld [vmem:[%s4 + $0x4] sm:$0xf]
        %v715 = vld [vmem:[%s4 + $0x8] sm:$0xf]
        %v716 = vld [vmem:[%s4 + $0xc] sm:$0xf]
        %v717 = vld [vmem:[%s4 + $0x10] sm:$0xf]
        %v718 = vld [vmem:[%s4 + $0x14] sm:$0xf]
        %v719 = vld [vmem:[%s4 + $0x18] sm:$0xf]
        %v720 = vld [vmem:[%s4 + $0x1c] sm:$0xf]
        %v721 = vld [vmem:[%s4 + $0x20] sm:$0xf]
        %v722 = vld [vmem:[%s4 + $0x24] sm:$0xf]
        %v723 = vld [vmem:[%s4 + $0x28] sm:$0xf]
        %v724 = vld [vmem:[%s4 + $0x2c] sm:$0xf]
        %v725 = vld [vmem:[%s4 + $0x30] sm:$0xf]
        %v726 = vld [vmem:[%s4 + $0x34] sm:$0xf]
        %v727 = vld [vmem:[%s4 + $0x38] sm:$0xf]
        %v728 = vld [vmem:[%s4 + $0x3c] sm:$0xf]
        %v729 = vlaneseq
        %v730 = vshrl.u32 %v729, 7
        %v731 = vsub.s32 2, %v730
        %v732 = vrot.slane %v337, %v731
        %v749 = vunpack.c.l.b16 %v713
        %v750 = vunpack.c.l.b16 %v714
        %v751 = vunpack.c.l.b16 %v715
        %v752 = vunpack.c.l.b16 %v716
        %v753 = vunpack.c.l.b16 %v717
        %v754 = vunpack.c.l.b16 %v718
        %v755 = vunpack.c.l.b16 %v719
        %v756 = vunpack.c.l.b16 %v720
        %v757 = vunpack.c.l.b16 %v721
        %v758 = vunpack.c.l.b16 %v722
        %v759 = vunpack.c.l.b16 %v723
        %v760 = vunpack.c.l.b16 %v724
        %v761 = vunpack.c.l.b16 %v725
        %v762 = vunpack.c.l.b16 %v726
        %v763 = vunpack.c.l.b16 %v727
        %v764 = vunpack.c.l.b16 %v728
        %v765 = vpack.c.b16 %v750, %v749
        %v766 = vpack.c.b16 %v752, %v751
        %v767 = vpack.c.b16 %v754, %v753
        %v768 = vpack.c.b16 %v756, %v755
        %v769 = vpack.c.b16 %v758, %v757
        %v770 = vpack.c.b16 %v760, %v759
        %v771 = vpack.c.b16 %v762, %v761
        %v772 = vpack.c.b16 %v764, %v763
        %781 = vmatprep.subr.bf16.mxu0 0
        %782 = vmatpush1.bf16.msra.mxu0 %v765
        %783 = vmatprep.subr.bf16.mxu0 0
        %784 = vmatpush1.bf16.msra.mxu0 %v766
        %785 = vmatprep.subr.bf16.mxu0 0
        %786 = vmatpush1.bf16.msra.mxu0 %v767
        %787 = vmatprep.subr.bf16.mxu0 0
        %788 = vmatpush1.bf16.msra.mxu0 %v768
        %789 = vmatprep.subr.bf16.mxu0 0
        %790 = vmatpush1.bf16.msra.mxu0 %v769
        %791 = vmatprep.subr.bf16.mxu0 0
        %792 = vmatpush1.bf16.msra.mxu0 %v770
        %793 = vmatprep.subr.bf16.mxu0 0
        %794 = vmatpush1.bf16.msra.mxu0 %v771
        %795 = vmatprep.subr.bf16.mxu0 0
        %796 = vmatpush1.bf16.msra.mxu0 %v772
        %797 = vmatprep.subr.bf16.mxu0 0
        %798 = vmatpush1.bf16.msra.mxu0 0
        %799 = vmatprep.subr.bf16.mxu0 0
        %800 = vmatpush1.bf16.msra.mxu0 0
        %801 = vmatprep.subr.bf16.mxu0 0
        %802 = vmatpush1.bf16.msra.mxu0 0
        %803 = vmatprep.subr.bf16.mxu0 0
        %804 = vmatpush1.bf16.msra.mxu0 0
        %805 = vmatprep.subr.bf16.mxu0 0
        %806 = vmatpush1.bf16.msra.mxu0 0
        %807 = vmatprep.subr.bf16.mxu0 0
        %808 = vmatpush1.bf16.msra.mxu0 0
        %809 = vmatprep.subr.bf16.mxu0 0
        %810 = vmatpush1.bf16.msra.mxu0 0
        %811 = vmatprep.subr.bf16.mxu0 0
        %812 = vmatpush1.bf16.msra.mxu0 0
        %813 = vmatprep.mubr.bf16.mxu0 0
        %814 = vmatmul.mubr.bf16.gmra.mrb[0].mxu0 %v712
        %v815 = vpop.f32.mrb[0].mxu0
        %v816 = vadd.f32 %v732, %v815
        %v817 = vpop.f32.mrb[0].mxu0
        %v818 = vpop.f32.mrb[0].mxu0
        %v819 = vadd.f32 %v732, %v818
        %v820 = vpop.f32.mrb[0].mxu0
        %821 = vdwg.mxu0
        %v822 = vmax.f32 %v816, 0.0
        %v823 = vmax.f32 %v819, 0.0
        %825 = vset.pattern.permute.xlu0 0
        %826 = vperm.xlu0 %825, %v709
        %v827 = vpop.permute.xlu0 %826
        %830 = vset.pattern.permute.xlu0 0
        %831 = vperm.xlu0 %830, %v711
        %v832 = vpop.permute.xlu0 %831
        %v834 = vmul.f32 %v827, %v822
        %v835 = vmul.f32 %v832, %v823
        %v836 = vadd.f32 %v834, %v835
        %v837 = vrot.slane %v836, 4
        %v838 = vadd.f32 %v836, %v837
        %v839 = vrot.slane %v838, 2
        %v840 = vadd.f32 %v838, %v839
        %v841 = vrot.slane %v840, 1
        %v842 = vadd.f32 %v840, %v841
        %v843 = vpack.c.bf16 %v842, %v842
        %v844 = vld [vmem:[%s5] sm:$0xf]
        %v845 = vld [vmem:[%s5 + $0x4] sm:$0xf]
        %v846 = vld [vmem:[%s5 + $0x8] sm:$0xf]
        %v847 = vld [vmem:[%s5 + $0xc] sm:$0xf]
        %v848 = vld [vmem:[%s5 + $0x10] sm:$0xf]
        %v849 = vld [vmem:[%s5 + $0x14] sm:$0xf]
        %v850 = vld [vmem:[%s5 + $0x18] sm:$0xf]
        %v851 = vld [vmem:[%s5 + $0x1c] sm:$0xf]
        %v852 = vld [vmem:[%s5 + $0x20] sm:$0xf]
        %v853 = vld [vmem:[%s5 + $0x24] sm:$0xf]
        %v854 = vld [vmem:[%s5 + $0x28] sm:$0xf]
        %v855 = vld [vmem:[%s5 + $0x2c] sm:$0xf]
        %v856 = vld [vmem:[%s5 + $0x30] sm:$0xf]
        %v857 = vld [vmem:[%s5 + $0x34] sm:$0xf]
        %v858 = vld [vmem:[%s5 + $0x38] sm:$0xf]
        %v859 = vld [vmem:[%s5 + $0x3c] sm:$0xf]
        %v876 = vunpack.c.l.b16 %v844
        %v877 = vunpack.c.l.b16 %v845
        %v878 = vunpack.c.l.b16 %v846
        %v879 = vunpack.c.l.b16 %v847
        %v880 = vunpack.c.l.b16 %v848
        %v881 = vunpack.c.l.b16 %v849
        %v882 = vunpack.c.l.b16 %v850
        %v883 = vunpack.c.l.b16 %v851
        %v884 = vunpack.c.l.b16 %v852
        %v885 = vunpack.c.l.b16 %v853
        %v886 = vunpack.c.l.b16 %v854
        %v887 = vunpack.c.l.b16 %v855
        %v888 = vunpack.c.l.b16 %v856
        %v889 = vunpack.c.l.b16 %v857
        %v890 = vunpack.c.l.b16 %v858
        %v891 = vunpack.c.l.b16 %v859
        %v892 = vpack.c.b16 %v877, %v876
        %v893 = vpack.c.b16 %v879, %v878
        %v894 = vpack.c.b16 %v881, %v880
        %v895 = vpack.c.b16 %v883, %v882
        %v896 = vpack.c.b16 %v885, %v884
        %v897 = vpack.c.b16 %v887, %v886
        %v898 = vpack.c.b16 %v889, %v888
        %v899 = vpack.c.b16 %v891, %v890
        %v909 = vrot.slane %v337, 3
        %911 = vmatprep.subr.bf16.mxu0 0
        %912 = vmatpush1.bf16.msra.mxu0 %v892
        %913 = vmatprep.subr.bf16.mxu0 0
        %914 = vmatpush1.bf16.msra.mxu0 %v893
        %915 = vmatprep.subr.bf16.mxu0 0
        %916 = vmatpush1.bf16.msra.mxu0 %v894
        %917 = vmatprep.subr.bf16.mxu0 0
        %918 = vmatpush1.bf16.msra.mxu0 %v895
        %919 = vmatprep.subr.bf16.mxu0 0
        %920 = vmatpush1.bf16.msra.mxu0 %v896
        %921 = vmatprep.subr.bf16.mxu0 0
        %922 = vmatpush1.bf16.msra.mxu0 %v897
        %923 = vmatprep.subr.bf16.mxu0 0
        %924 = vmatpush1.bf16.msra.mxu0 %v898
        %925 = vmatprep.subr.bf16.mxu0 0
        %926 = vmatpush1.bf16.msra.mxu0 %v899
        %927 = vmatprep.subr.bf16.mxu0 0
        %928 = vmatpush1.bf16.msra.mxu0 0
        %929 = vmatprep.subr.bf16.mxu0 0
        %930 = vmatpush1.bf16.msra.mxu0 0
        %931 = vmatprep.subr.bf16.mxu0 0
        %932 = vmatpush1.bf16.msra.mxu0 0
        %933 = vmatprep.subr.bf16.mxu0 0
        %934 = vmatpush1.bf16.msra.mxu0 0
        %935 = vmatprep.subr.bf16.mxu0 0
        %936 = vmatpush1.bf16.msra.mxu0 0
        %937 = vmatprep.subr.bf16.mxu0 0
        %938 = vmatpush1.bf16.msra.mxu0 0
        %939 = vmatprep.subr.bf16.mxu0 0
        %940 = vmatpush1.bf16.msra.mxu0 0
        %941 = vmatprep.subr.bf16.mxu0 0
        %942 = vmatpush1.bf16.msra.mxu0 0
        %943 = vmatprep.mubr.bf16.mxu0 0
        %944 = vmatmul.mubr.bf16.gmra.mrb[0].mxu0 %v843
        %v945 = vpop.f32.mrb[0].mxu0
        %v946 = vadd.f32 %v909, %v945
        %v947 = vpop.f32.mrb[0].mxu0
        %v948 = vpop.f32.mrb[0].mxu0
        %v949 = vpop.f32.mrb[0].mxu0
        %950 = vdwg.mxu0
        %v951 = vtanh.pop %v946
        %v952 = vpack.c.bf16 %v951, %v951
        %v953 = vld [vmem:[%s6] sm:$0xf]
        %v954 = vld [vmem:[%s6 + $0x4] sm:$0xf]
        %v955 = vld [vmem:[%s6 + $0x8] sm:$0xf]
        %v956 = vld [vmem:[%s6 + $0xc] sm:$0xf]
        %v957 = vld [vmem:[%s6 + $0x10] sm:$0xf]
        %v958 = vld [vmem:[%s6 + $0x14] sm:$0xf]
        %v959 = vld [vmem:[%s6 + $0x18] sm:$0xf]
        %v960 = vld [vmem:[%s6 + $0x1c] sm:$0xf]
        %v961 = vld [vmem:[%s6 + $0x20] sm:$0xf]
        %v962 = vld [vmem:[%s6 + $0x24] sm:$0xf]
        %v963 = vld [vmem:[%s6 + $0x28] sm:$0xf]
        %v964 = vld [vmem:[%s6 + $0x2c] sm:$0xf]
        %v965 = vld [vmem:[%s6 + $0x30] sm:$0xf]
        %v966 = vld [vmem:[%s6 + $0x34] sm:$0xf]
        %v967 = vld [vmem:[%s6 + $0x38] sm:$0xf]
        %v968 = vld [vmem:[%s6 + $0x3c] sm:$0xf]
        %v969 = vld [vmem:[%s8] sm:$0x1]
        %v986 = vunpack.c.l.b16 %v953
        %v987 = vunpack.c.l.b16 %v954
        %v988 = vunpack.c.l.b16 %v955
        %v989 = vunpack.c.l.b16 %v956
        %v990 = vunpack.c.l.b16 %v957
        %v991 = vunpack.c.l.b16 %v958
        %v992 = vunpack.c.l.b16 %v959
        %v993 = vunpack.c.l.b16 %v960
        %v994 = vunpack.c.l.b16 %v961
        %v995 = vunpack.c.l.b16 %v962
        %v996 = vunpack.c.l.b16 %v963
        %v997 = vunpack.c.l.b16 %v964
        %v998 = vunpack.c.l.b16 %v965
        %v999 = vunpack.c.l.b16 %v966
        %v1000 = vunpack.c.l.b16 %v967
        %v1001 = vunpack.c.l.b16 %v968
        %v1002 = vpack.c.b16 %v987, %v986
        %v1003 = vpack.c.b16 %v989, %v988
        %v1004 = vpack.c.b16 %v991, %v990
        %v1005 = vpack.c.b16 %v993, %v992
        %v1006 = vpack.c.b16 %v995, %v994
        %v1007 = vpack.c.b16 %v997, %v996
        %v1008 = vpack.c.b16 %v999, %v998
        %v1009 = vpack.c.b16 %v1001, %v1000
        %1018 = vmatprep.subr.bf16.mxu0 0
        %1019 = vmatpush1.bf16.msra.mxu0 %v1002
        %1020 = vmatprep.subr.bf16.mxu0 0
        %1021 = vmatpush1.bf16.msra.mxu0 %v1003
        %1022 = vmatprep.subr.bf16.mxu0 0
        %1023 = vmatpush1.bf16.msra.mxu0 %v1004
        %1024 = vmatprep.subr.bf16.mxu0 0
        %1025 = vmatpush1.bf16.msra.mxu0 %v1005
        %1026 = vmatprep.subr.bf16.mxu0 0
        %1027 = vmatpush1.bf16.msra.mxu0 %v1006
        %1028 = vmatprep.subr.bf16.mxu0 0
        %1029 = vmatpush1.bf16.msra.mxu0 %v1007
        %1030 = vmatprep.subr.bf16.mxu0 0
        %1031 = vmatpush1.bf16.msra.mxu0 %v1008
        %1032 = vmatprep.subr.bf16.mxu0 0
        %1033 = vmatpush1.bf16.msra.mxu0 %v1009
        %1034 = vmatprep.subr.bf16.mxu0 0
        %1035 = vmatpush1.bf16.msra.mxu0 0
        %1036 = vmatprep.subr.bf16.mxu0 0
        %1037 = vmatpush1.bf16.msra.mxu0 0
        %1038 = vmatprep.subr.bf16.mxu0 0
        %1039 = vmatpush1.bf16.msra.mxu0 0
        %1040 = vmatprep.subr.bf16.mxu0 0
        %1041 = vmatpush1.bf16.msra.mxu0 0
        %1042 = vmatprep.subr.bf16.mxu0 0
        %1043 = vmatpush1.bf16.msra.mxu0 0
        %1044 = vmatprep.subr.bf16.mxu0 0
        %1045 = vmatpush1.bf16.msra.mxu0 0
        %1046 = vmatprep.subr.bf16.mxu0 0
        %1047 = vmatpush1.bf16.msra.mxu0 0
        %1048 = vmatprep.subr.bf16.mxu0 0
        %1049 = vmatpush1.bf16.msra.mxu0 0
        %1050 = vmatprep.mubr.bf16.mxu0 0
        %1051 = vmatmul.mubr.bf16.gmra.mrb[0].mxu0 %v952
        %v1052 = vpop.f32.mrb[0].mxu0
        %v1053 = vadd.f32 %v969, %v1052
        %v1054 = vpop.f32.mrb[0].mxu0
        %v1055 = vpop.f32.mrb[0].mxu0
        %v1056 = vpop.f32.mrb[0].mxu0
        %1057 = vdwg.mxu0
        %v1058 = vxor.u32 %v1053, 2147483648
        %v1059 = vmul.f32 %v1058, 1.442695
        %v1060 = vpow.pop %v1059
        %v1061 = vadd.f32 %v1060, 1.0
        %v1062 = vrcp.pop %v1061
        %v1063 = vmul.f32 1.0, %v1062
        %1064 = vst [vmem:[%s325] sm:$0x1] %v1063
        %s1065 = sand.u32 %s225, 1
        %s1066 = scalar_lea.sflag [#allocation3], %s1065
        %s1067 = sand.u32 %s225, 1
        %s1068 = scalar_lea.vmem [#allocation2], %s1067
        // Predicated region
        $region57: #{gnn_regvd_forward.1} parent=55 // pred_check
          %p1069 = pneg %p235
        $region58: #{gnn_regvd_forward.1} parent=55 // pred_check_branch
          %1071 = sbr.rel (%p1069) target = $region60
        $region59: #{gnn_regvd_forward.1} parent=55 // pred_region
          %s1073 = ssub.s32 16, 16
          %1074 = vsyncadd %s1066, %s1073
          %s1075 = smul.addr %s23, 16
          %s1076 = scalar_lea.hbm %s9, %s1075
          %s1078 = sshll.u32 %s1068, 4
          %s1079 = int_to_ptr.vmem [resolvable:$true] %s1078
          %1081 = dma.vmem_to_hbm [thread:$0]  %s1079, 16, %s1076, %s1066
        $region60: #{gnn_regvd_forward.1} parent=55 // pred_fallthru
          _
      $region56: #{gnn_regvd_forward.1} parent=5 // pred_fallthru
        _
      %p1082 = scmp.le.s32.totalorder 2, %s18
      // Predicated region
      $region61: #{gnn_regvd_forward.1} parent=5 // pred_check
        %p1083 = pneg %p1082
      $region62: #{gnn_regvd_forward.1} parent=5 // pred_check_branch
        %1085 = sbr.rel (%p1083) target = $region64
      $region63: #{gnn_regvd_forward.1} parent=5 // pred_region
        %s1086 = ssub.s32 %s18, 2
        // Predicated region
        $region65: #{gnn_regvd_forward.1} parent=63 // pred_check
          %p1087 = pneg %p241
        $region66: #{gnn_regvd_forward.1} parent=63 // pred_check_branch
          %1089 = sbr.rel (%p1087) target = $region68
        $region67: #{gnn_regvd_forward.1} parent=63 // pred_region
          %s1090 = sand.u32 %s226, 1
          %s1091 = scalar_lea.sflag [#allocation3], %s1090
          %s1092 = sand.u32 %s226, 1
          %s1093 = scalar_lea.vmem [#allocation2], %s1092
          %1094 = dma.done %s1091, 16
        $region68: #{gnn_regvd_forward.1} parent=63 // pred_fallthru
          _
      $region64: #{gnn_regvd_forward.1} parent=5 // pred_fallthru
        _
    $region6: #{gnn_regvd_forward.1} parent=1 // loop_footer
      %s22 = sadd.s32 1, %s18
    $region7: #{gnn_regvd_forward.1} parent=1 // loop_footer_branch
      %17 = sbr.rel target = $region3
    $region8: #{gnn_regvd_forward.1} parent=1 // loop_exit
      _
    %1095 = vsyncpa [#allocation3], 1
    %s1096 = scalar_lea.sflag [#allocation3], 1
    %1097 = vsyncpa %s1096, 1

</llo_original>
